<compile_context>
chip_gen: v7x
topology: tpu7x:2x2x1
jax: 0.10.0
libtpu: 0.0.40
codegen_flags: <defaults>
</compile_context>

<pallas_src>
import functools

import jax
import jax.numpy as jnp
from jax.experimental import pallas as pl
from jax.experimental.pallas import tpu as pltpu

NEGATIVE_SLOPE = 0.01  # torch.nn.LeakyReLU default


def _round_up(x, m):
    return ((x + m - 1) // m) * m


def _naive_mlp_kernel(num_layers, *refs):
    # refs = (x_ref,
    #         w0, b0, ..., w_{L-1}, b_{L-1},          # hidden Linear layers
    #         wout_0, wout_1, ..., wout_L,            # out_fc0 weight, row-split per feature
    #         b_out,                                  # out_fc0 bias (1, out_pad)
    #         out_ref)
    x_ref = refs[0]
    out_ref = refs[-1]
    params = refs[1:-1]
    layer_params = params[: 2 * num_layers]
    wout_slices = params[2 * num_layers: 2 * num_layers + num_layers + 1]
    b_out_ref = params[-1]

    h = x_ref[...]  # (TILE_M, z_dim) f32

    # y = b_out + sum_i feats[i] @ W_out[rows_i]   (feats[0] == x)
    acc = b_out_ref[...] + jnp.dot(
        h, wout_slices[0][...], preferred_element_type=jnp.float32
    )

    for i in range(num_layers):
        w = layer_params[2 * i][...]
        b = layer_params[2 * i + 1][...]
        h = jnp.dot(h, w, preferred_element_type=jnp.float32) + b
        # LeakyReLU on the VPU
        h = jnp.where(h > 0, h, NEGATIVE_SLOPE * h)
        acc = acc + jnp.dot(
            h, wout_slices[i + 1][...], preferred_element_type=jnp.float32
        )

    out_ref[...] = acc.astype(out_ref.dtype)


def init_naive_mlp_params(key, z_dim, out_dim, hidden_dims):
    """Deterministic synthetic params (weights stored (in, out), biases (out,))."""
    params = []
    c_in = z_dim
    c_wide = z_dim
    for c_out in hidden_dims:
        key, kw, kb = jax.random.split(key, 3)
        bound = 1.0 / jnp.sqrt(c_in)
        w = jax.random.uniform(kw, (c_in, c_out), jnp.float32, -bound, bound)
        b = jax.random.uniform(kb, (c_out,), jnp.float32, -bound, bound)
        params.append((w, b))
        c_wide += c_out
        c_in = c_out
    key, kw, kb = jax.random.split(key, 3)
    bound = 1.0 / jnp.sqrt(c_wide)
    w_out = jax.random.uniform(kw, (c_wide, out_dim), jnp.float32, -bound, bound)
    b_out = jax.random.uniform(kb, (out_dim,), jnp.float32, -bound, bound)
    params.append((w_out, b_out))
    return params


def naive_mlp_pallas(x, params, out_dim, tile_m=512):
    """x: (..., z_dim) f32.  params: [(W(in,out), b(out,)), ..., (W_out, b_out)]."""
    *lead, z_dim = x.shape
    m = 1
    for d in lead:
        m *= d
    x2d = x.reshape(m, z_dim).astype(jnp.float32)

    num_layers = len(params) - 1
    hidden_dims = [params[i][0].shape[1] for i in range(num_layers)]

    # --- row tiling over M: pad M so every tile is full and sublane-aligned ---
    tile_m = min(tile_m, _round_up(m, 8))
    m_pad = _round_up(m, tile_m)
    if m_pad != m:
        x2d = jnp.pad(x2d, ((0, m_pad - m), (0, 0)))

    # --- adaptive lane padding of the output ------------------------------
    # Pad out_dim to a multiple of 128 (unmasked full-lane vst) only when the
    # padded width is at most 2x out_dim; for tiny out_dim the extra HBM write
    # traffic of padding would dominate this memory-bound kernel, so we keep
    # the natural width (block last dim == full array dim is always legal).
    out_128 = _round_up(out_dim, 128)
    out_pad = out_128 if out_128 <= 2 * out_dim else out_dim
    w_out, b_out = params[-1]

    # Pre-split W_out rows per feature block (x, h0, h1, ...) and zero-pad lanes.
    feat_dims = [z_dim] + hidden_dims
    wout_slices = []
    off = 0
    for d in feat_dims:
        w_sl = w_out[off:off + d, :].astype(jnp.float32)
        if out_pad != out_dim:
            w_sl = jnp.pad(w_sl, ((0, 0), (0, out_pad - out_dim)))
        wout_slices.append(w_sl)
        off += d
    b_out_p = b_out.astype(jnp.float32)
    if out_pad != out_dim:
        b_out_p = jnp.pad(b_out_p, (0, out_pad - out_dim))
    b_out_p = b_out_p.reshape(1, -1)

    flat_args = [x2d]
    for w, b in params[:-1]:
        flat_args.append(w.astype(jnp.float32))
        flat_args.append(b.astype(jnp.float32).reshape(1, -1))  # keep biases 2-D
    flat_args.extend(wout_slices)
    flat_args.append(b_out_p)

    kernel = functools.partial(_naive_mlp_kernel, num_layers)

    grid = (m_pad // tile_m,)
    in_specs = [pl.BlockSpec((tile_m, z_dim), lambda i: (i, 0))]  # row-tiled x
    for a in flat_args[1:]:
        # Full-array blocks with a constant index_map -> weights/biases are
        # DMA'd once and stay resident in VMEM across grid steps.
        in_specs.append(pl.BlockSpec(a.shape, lambda i: (0, 0)))
    out_specs = pl.BlockSpec((tile_m, out_pad), lambda i: (i, 0))

    # --- advisory cost estimate for the XLA scheduler ----------------------
    flops = 0
    c_in = z_dim
    for c_out in hidden_dims:
        flops += 2 * m_pad * c_in * c_out
        c_in = c_out
    c_wide = z_dim + sum(hidden_dims)
    flops += 2 * m_pad * c_wide * out_pad
    bytes_accessed = int(x2d.size) * 4 + m_pad * out_pad * 4
    for a in flat_args[1:]:
        bytes_accessed += int(a.size) * 4
    cost = pl.CostEstimate(
        flops=int(flops), transcendentals=0, bytes_accessed=int(bytes_accessed)
    )

    out = pl.pallas_call(
        kernel,
        out_shape=jax.ShapeDtypeStruct((m_pad, out_pad), jnp.float32),
        grid=grid,
        in_specs=in_specs,
        out_specs=out_specs,
        compiler_params=pltpu.CompilerParams(
            dimension_semantics=("parallel",),
        ),
        cost_estimate=cost,
    )(*flat_args)

    return out[:m, :out_dim].reshape(*lead, out_dim).astype(x.dtype)


def naive_mlp_reference(x, params, out_dim):
    """Pure-JAX reference matching the PyTorch forward (use_bn=False)."""
    feats = [x]
    h = x
    for w, b in params[:-1]:
        h = h @ w + b
        h = jnp.where(h > 0, h, NEGATIVE_SLOPE * h)
        feats.append(h)
    f = jnp.concatenate(feats, axis=-1)
    w_out, b_out = params[-1]
    return f @ w_out + b_out


if __name__ == "__main__":
    # Small shapes consistent with the module: feature dim z_dim on the last
    # axis, arbitrary leading (batch, seq) dims.
    z_dim = 16
    out_dim = 8
    hidden_dims = (32, 64)
    batch, seq = 2, 8

    key = jax.random.PRNGKey(0)
    key, kx = jax.random.split(key)
    x = jax.random.normal(kx, (batch, seq, z_dim), jnp.float32)

    params = init_naive_mlp_params(key, z_dim, out_dim, hidden_dims)

    y = naive_mlp_pallas(x, params, out_dim)
    y = jax.block_until_ready(y)

    y_ref = naive_mlp_reference(x, params, out_dim)
    assert y.shape == (batch, seq, out_dim), y.shape
    assert jnp.allclose(y, y_ref, atol=1e-5, rtol=1e-5), float(
        jnp.max(jnp.abs(y - y_ref))
    )

    print("KERNEL_OK")
</pallas_src>

<mosaic_0001>
module attributes {stable_mosaic.version = 11 : i64} {
  func.func @_naive_mlp_kernel(%arg0: i32, %arg1: memref<16x16xf32, #tpu.memory_space<vmem>>, %arg2: memref<16x32xf32, #tpu.memory_space<vmem>>, %arg3: memref<1x32xf32, #tpu.memory_space<vmem>>, %arg4: memref<32x64xf32, #tpu.memory_space<vmem>>, %arg5: memref<1x64xf32, #tpu.memory_space<vmem>>, %arg6: memref<16x8xf32, #tpu.memory_space<vmem>>, %arg7: memref<32x8xf32, #tpu.memory_space<vmem>>, %arg8: memref<64x8xf32, #tpu.memory_space<vmem>>, %arg9: memref<1x8xf32, #tpu.memory_space<vmem>>, %arg10: memref<16x8xf32, #tpu.memory_space<vmem>>) attributes {dimension_semantics = [#tpu.dimension_semantics<parallel>], iteration_bounds = array<i64: 1>, scalar_prefetch = 0 : i64, scratch_operands = 0 : i64, tpu.core_type = #tpu.core_type<tc>, window_params = [{transform_indices = @transform_0, window_bounds = array<i64: 16, 16>}, {pipeline_mode = #tpu.pipeline_mode<synchronous>, transform_indices = @transform_1, window_bounds = array<i64: 16, 32>}, {pipeline_mode = #tpu.pipeline_mode<synchronous>, transform_indices = @transform_2, window_bounds = array<i64: 1, 32>}, {pipeline_mode = #tpu.pipeline_mode<synchronous>, transform_indices = @transform_3, window_bounds = array<i64: 32, 64>}, {pipeline_mode = #tpu.pipeline_mode<synchronous>, transform_indices = @transform_4, window_bounds = array<i64: 1, 64>}, {pipeline_mode = #tpu.pipeline_mode<synchronous>, transform_indices = @transform_5, window_bounds = array<i64: 16, 8>}, {pipeline_mode = #tpu.pipeline_mode<synchronous>, transform_indices = @transform_6, window_bounds = array<i64: 32, 8>}, {pipeline_mode = #tpu.pipeline_mode<synchronous>, transform_indices = @transform_7, window_bounds = array<i64: 64, 8>}, {pipeline_mode = #tpu.pipeline_mode<synchronous>, transform_indices = @transform_8, window_bounds = array<i64: 1, 8>}, {transform_indices = @transform_9, window_bounds = array<i64: 16, 8>}]} {
    %c0 = arith.constant 0 : index
    %c0_0 = arith.constant 0 : index
    %0 = vector.load %arg1[%c0, %c0_0] : memref<16x16xf32, #tpu.memory_space<vmem>>, vector<16x16xf32>
    %c0_1 = arith.constant 0 : index
    %c0_2 = arith.constant 0 : index
    %1 = vector.load %arg9[%c0_1, %c0_2] : memref<1x8xf32, #tpu.memory_space<vmem>>, vector<1x8xf32>
    %c0_3 = arith.constant 0 : index
    %c0_4 = arith.constant 0 : index
    %2 = vector.load %arg6[%c0_3, %c0_4] : memref<16x8xf32, #tpu.memory_space<vmem>>, vector<16x8xf32>
    %cst = arith.constant dense<0.000000e+00> : vector<16x8xf32>
    %3 = tpu.matmul %0, %2, %cst {dimension_numbers = #tpu.dot_dimension_numbers<[1], [0], [0], [1], [0, 0, 1, 1], [], []>} : vector<16x16xf32>, vector<16x8xf32>, vector<16x8xf32> -> vector<16x8xf32>
    %4 = vector.broadcast %1 : vector<1x8xf32> to vector<16x8xf32>
    %5 = arith.addf %4, %3 : vector<16x8xf32>
    %c0_5 = arith.constant 0 : index
    %c0_6 = arith.constant 0 : index
    %6 = vector.load %arg2[%c0_5, %c0_6] : memref<16x32xf32, #tpu.memory_space<vmem>>, vector<16x32xf32>
    %c0_7 = arith.constant 0 : index
    %c0_8 = arith.constant 0 : index
    %7 = vector.load %arg3[%c0_7, %c0_8] : memref<1x32xf32, #tpu.memory_space<vmem>>, vector<1x32xf32>
    %cst_9 = arith.constant dense<0.000000e+00> : vector<16x32xf32>
    %8 = tpu.matmul %0, %6, %cst_9 {dimension_numbers = #tpu.dot_dimension_numbers<[1], [0], [0], [1], [0, 0, 1, 1], [], []>} : vector<16x16xf32>, vector<16x32xf32>, vector<16x32xf32> -> vector<16x32xf32>
    %9 = vector.broadcast %7 : vector<1x32xf32> to vector<16x32xf32>
    %10 = arith.addf %8, %9 : vector<16x32xf32>
    %cst_10 = arith.constant 0.000000e+00 : f32
    %11 = vector.broadcast %cst_10 : f32 to vector<16x32xf32>
    %12 = arith.cmpf ogt, %10, %11 : vector<16x32xf32>
    %cst_11 = arith.constant 0.00999999977 : f32
    %13 = vector.broadcast %cst_11 : f32 to vector<16x32xf32>
    %14 = arith.mulf %13, %10 : vector<16x32xf32>
    %15 = arith.select %12, %10, %14 : vector<16x32xi1>, vector<16x32xf32>
    %c0_12 = arith.constant 0 : index
    %c0_13 = arith.constant 0 : index
    %16 = vector.load %arg7[%c0_12, %c0_13] : memref<32x8xf32, #tpu.memory_space<vmem>>, vector<32x8xf32>
    %cst_14 = arith.constant dense<0.000000e+00> : vector<16x8xf32>
    %17 = tpu.matmul %15, %16, %cst_14 {dimension_numbers = #tpu.dot_dimension_numbers<[1], [0], [0], [1], [0, 0, 1, 1], [], []>} : vector<16x32xf32>, vector<32x8xf32>, vector<16x8xf32> -> vector<16x8xf32>
    %18 = arith.addf %5, %17 : vector<16x8xf32>
    %c0_15 = arith.constant 0 : index
    %c0_16 = arith.constant 0 : index
    %19 = vector.load %arg4[%c0_15, %c0_16] : memref<32x64xf32, #tpu.memory_space<vmem>>, vector<32x64xf32>
    %c0_17 = arith.constant 0 : index
    %c0_18 = arith.constant 0 : index
    %20 = vector.load %arg5[%c0_17, %c0_18] : memref<1x64xf32, #tpu.memory_space<vmem>>, vector<1x64xf32>
    %cst_19 = arith.constant dense<0.000000e+00> : vector<16x64xf32>
    %21 = tpu.matmul %15, %19, %cst_19 {dimension_numbers = #tpu.dot_dimension_numbers<[1], [0], [0], [1], [0, 0, 1, 1], [], []>} : vector<16x32xf32>, vector<32x64xf32>, vector<16x64xf32> -> vector<16x64xf32>
    %22 = vector.broadcast %20 : vector<1x64xf32> to vector<16x64xf32>
    %23 = arith.addf %21, %22 : vector<16x64xf32>
    %cst_20 = arith.constant 0.000000e+00 : f32
    %24 = vector.broadcast %cst_20 : f32 to vector<16x64xf32>
    %25 = arith.cmpf ogt, %23, %24 : vector<16x64xf32>
    %cst_21 = arith.constant 0.00999999977 : f32
    %26 = vector.broadcast %cst_21 : f32 to vector<16x64xf32>
    %27 = arith.mulf %26, %23 : vector<16x64xf32>
    %28 = arith.select %25, %23, %27 : vector<16x64xi1>, vector<16x64xf32>
    %c0_22 = arith.constant 0 : index
    %c0_23 = arith.constant 0 : index
    %29 = vector.load %arg8[%c0_22, %c0_23] : memref<64x8xf32, #tpu.memory_space<vmem>>, vector<64x8xf32>
    %cst_24 = arith.constant dense<0.000000e+00> : vector<16x8xf32>
    %30 = tpu.matmul %28, %29, %cst_24 {dimension_numbers = #tpu.dot_dimension_numbers<[1], [0], [0], [1], [0, 0, 1, 1], [], []>} : vector<16x64xf32>, vector<64x8xf32>, vector<16x8xf32> -> vector<16x8xf32>
    %31 = arith.addf %18, %30 : vector<16x8xf32>
    %c0_25 = arith.constant 0 : index
    %c0_26 = arith.constant 0 : index
    %32 = vector.load %arg10[%c0_25, %c0_26] : memref<16x8xf32, #tpu.memory_space<vmem>>, vector<16x8xf32>
    tpu.vector_store %arg10[%c0_25, %c0_26], %31 {strides = array<i32>} : memref<16x8xf32, #tpu.memory_space<vmem>>, vector<16x8xf32>,
    return
  }
  func.func @transform_0(%arg0: i32) -> (i32, i32) {
    %c0_i32 = arith.constant 0 : i32
    %c0_i32_0 = arith.constant 0 : i32
    return %arg0, %c0_i32 : i32, i32
  }
  func.func @transform_1(%arg0: i32) -> (i32, i32) {
    %c0_i32 = arith.constant 0 : i32
    %c0_i32_0 = arith.constant 0 : i32
    %c0_i32_1 = arith.constant 0 : i32
    return %c0_i32, %c0_i32_0 : i32, i32
  }
  func.func @transform_2(%arg0: i32) -> (i32, i32) {
    %c0_i32 = arith.constant 0 : i32
    %c0_i32_0 = arith.constant 0 : i32
    %c0_i32_1 = arith.constant 0 : i32
    return %c0_i32, %c0_i32_0 : i32, i32
  }
  func.func @transform_3(%arg0: i32) -> (i32, i32) {
    %c0_i32 = arith.constant 0 : i32
    %c0_i32_0 = arith.constant 0 : i32
    %c0_i32_1 = arith.constant 0 : i32
    return %c0_i32, %c0_i32_0 : i32, i32
  }
  func.func @transform_4(%arg0: i32) -> (i32, i32) {
    %c0_i32 = arith.constant 0 : i32
    %c0_i32_0 = arith.constant 0 : i32
    %c0_i32_1 = arith.constant 0 : i32
    return %c0_i32, %c0_i32_0 : i32, i32
  }
  func.func @transform_5(%arg0: i32) -> (i32, i32) {
    %c0_i32 = arith.constant 0 : i32
    %c0_i32_0 = arith.constant 0 : i32
    %c0_i32_1 = arith.constant 0 : i32
    return %c0_i32, %c0_i32_0 : i32, i32
  }
  func.func @transform_6(%arg0: i32) -> (i32, i32) {
    %c0_i32 = arith.constant 0 : i32
    %c0_i32_0 = arith.constant 0 : i32
    %c0_i32_1 = arith.constant 0 : i32
    return %c0_i32, %c0_i32_0 : i32, i32
  }
  func.func @transform_7(%arg0: i32) -> (i32, i32) {
    %c0_i32 = arith.constant 0 : i32
    %c0_i32_0 = arith.constant 0 : i32
    %c0_i32_1 = arith.constant 0 : i32
    return %c0_i32, %c0_i32_0 : i32, i32
  }
  func.func @transform_8(%arg0: i32) -> (i32, i32) {
    %c0_i32 = arith.constant 0 : i32
    %c0_i32_0 = arith.constant 0 : i32
    %c0_i32_1 = arith.constant 0 : i32
    return %c0_i32, %c0_i32_0 : i32, i32
  }
  func.func @transform_9(%arg0: i32) -> (i32, i32) {
    %c0_i32 = arith.constant 0 : i32
    %c0_i32_0 = arith.constant 0 : i32
    return %arg0, %c0_i32 : i32, i32
  }
}

</mosaic_0001>

<llo_original>
// kernel: tpu_custom_call.1
$region0: #{tpu_custom_call.1}
  #allocation0 [shape = 'u32[]', space=smem, size = 0x4, offset = 0x4, fixed_abs, tag = 'smem constant byte address 0x4 - core index']
  #allocation1 [shape = 'u32[144,128]{1,0:T(1,128)}', space=vmem, size = 0x12000, scoped, tag = 'internal scratch']
  %s0 = inlined_call_operand.vmem [shape: f32[16,16], index: 0, kind: input, shape index: {}]
  %s1 = inlined_call_operand.vmem [shape: f32[16,32], index: 1, kind: input, shape index: {}]
  %s2 = inlined_call_operand.vmem [shape: f32[1,32], index: 2, kind: input, shape index: {}]
  %s3 = inlined_call_operand.vmem [shape: f32[32,64], index: 3, kind: input, shape index: {}]
  %s4 = inlined_call_operand.vmem [shape: f32[1,64], index: 4, kind: input, shape index: {}]
  %s5 = inlined_call_operand.vmem [shape: f32[16,8], index: 5, kind: input, shape index: {}]
  %s6 = inlined_call_operand.vmem [shape: f32[32,8], index: 6, kind: input, shape index: {}]
  %s7 = inlined_call_operand.vmem [shape: f32[64,8], index: 7, kind: input, shape index: {}]
  %s8 = inlined_call_operand.vmem [shape: f32[1,8], index: 8, kind: input, shape index: {}]
  %s9 = inlined_call_operand.vmem [shape: f32[16,8], index: 9, kind: output, shape index: {}]
  %s10 = sld [smem:[#allocation0]]
  $region46: #{tpu_custom_call.1} parent=0
    _
  %s12 = ssub.s32 1, %s10
  %s13 = scalar_select 0, %s12, %s10
  // Predicated region
  $region2: #{tpu_custom_call.1} parent=0 // pred_check
    _
  $region3: #{tpu_custom_call.1} parent=0 // pred_check_branch
    %15 = sbr.rel (0) target = $region5
  $region4: #{tpu_custom_call.1} parent=0 // pred_region
    _
  $region5: #{tpu_custom_call.1} parent=0 // pred_fallthru
    _
  // Predicated region
  $region6: #{tpu_custom_call.1} parent=0 // pred_check
    _
  $region7: #{tpu_custom_call.1} parent=0 // pred_check_branch
    %17 = sbr.rel (0) target = $region9
  $region8: #{tpu_custom_call.1} parent=0 // pred_region
    _
  $region9: #{tpu_custom_call.1} parent=0 // pred_fallthru
    _
  // Predicated region
  $region10: #{tpu_custom_call.1} parent=0 // pred_check
    _
  $region11: #{tpu_custom_call.1} parent=0 // pred_check_branch
    %19 = sbr.rel (0) target = $region13
  $region12: #{tpu_custom_call.1} parent=0 // pred_region
    _
  $region13: #{tpu_custom_call.1} parent=0 // pred_fallthru
    _
  // Predicated region
  $region14: #{tpu_custom_call.1} parent=0 // pred_check
    _
  $region15: #{tpu_custom_call.1} parent=0 // pred_check_branch
    %21 = sbr.rel (0) target = $region17
  $region16: #{tpu_custom_call.1} parent=0 // pred_region
    _
  $region17: #{tpu_custom_call.1} parent=0 // pred_fallthru
    _
  // Predicated region
  $region18: #{tpu_custom_call.1} parent=0 // pred_check
    _
  $region19: #{tpu_custom_call.1} parent=0 // pred_check_branch
    %23 = sbr.rel (0) target = $region21
  $region20: #{tpu_custom_call.1} parent=0 // pred_region
    _
  $region21: #{tpu_custom_call.1} parent=0 // pred_fallthru
    _
  // Predicated region
  $region22: #{tpu_custom_call.1} parent=0 // pred_check
    _
  $region23: #{tpu_custom_call.1} parent=0 // pred_check_branch
    %25 = sbr.rel (0) target = $region25
  $region24: #{tpu_custom_call.1} parent=0 // pred_region
    _
  $region25: #{tpu_custom_call.1} parent=0 // pred_fallthru
    _
  // Predicated region
  $region26: #{tpu_custom_call.1} parent=0 // pred_check
    _
  $region27: #{tpu_custom_call.1} parent=0 // pred_check_branch
    %27 = sbr.rel (0) target = $region29
  $region28: #{tpu_custom_call.1} parent=0 // pred_region
    _
  $region29: #{tpu_custom_call.1} parent=0 // pred_fallthru
    _
  // Predicated region
  $region30: #{tpu_custom_call.1} parent=0 // pred_check
    _
  $region31: #{tpu_custom_call.1} parent=0 // pred_check_branch
    %29 = sbr.rel (0) target = $region33
  $region32: #{tpu_custom_call.1} parent=0 // pred_region
    _
  $region33: #{tpu_custom_call.1} parent=0 // pred_fallthru
    _
  // Predicated region
  $region34: #{tpu_custom_call.1} parent=0 // pred_check
    _
  $region35: #{tpu_custom_call.1} parent=0 // pred_check_branch
    %31 = sbr.rel (0) target = $region37
  $region36: #{tpu_custom_call.1} parent=0 // pred_region
    _
  $region37: #{tpu_custom_call.1} parent=0 // pred_fallthru
    _
  %v32 = vld [vmem:[%s0] sm:$0xff]
  %v33 = vld [vmem:[%s0 + $0x8] sm:$0xff]
  %v34 = vld [vmem:[%s8] sm:$0x1]
  %v35 = vld [vmem:[%s5] sm:$0xff]
  %v36 = vld [vmem:[%s5 + $0x8] sm:$0xff]
  %vm37 = vcmask 130048
  %v39 = vsel %vm37, %v32, 0
  %v42 = vsel %vm37, %v33, 0
  %44 = vmatprep.subr.mxu0 0.0
  %45 = vmatpush1.msra.mxu0 %v35
  %46 = vmatprep.subr.mxu0 0.0
  %47 = vmatpush1.msra.mxu0 %v36
  %48 = vmatprep.subr.mxu0 0.0
  %49 = vmatpush1.msra.mxu0 0.0
  %50 = vmatprep.subr.mxu0 0.0
  %51 = vmatpush1.msra.mxu0 0.0
  %52 = vmatprep.subr.mxu0 0.0
  %53 = vmatpush1.msra.mxu0 0.0
  %54 = vmatprep.subr.mxu0 0.0
  %55 = vmatpush1.msra.mxu0 0.0
  %56 = vmatprep.subr.mxu0 0.0
  %57 = vmatpush1.msra.mxu0 0.0
  %58 = vmatprep.subr.mxu0 0.0
  %59 = vmatpush1.msra.mxu0 0.0
  %60 = vmatprep.subr.mxu0 0.0
  %61 = vmatpush1.msra.mxu0 0.0
  %62 = vmatprep.subr.mxu0 0.0
  %63 = vmatpush1.msra.mxu0 0.0
  %64 = vmatprep.subr.mxu0 0.0
  %65 = vmatpush1.msra.mxu0 0.0
  %66 = vmatprep.subr.mxu0 0.0
  %67 = vmatpush1.msra.mxu0 0.0
  %68 = vmatprep.subr.mxu0 0.0
  %69 = vmatpush1.msra.mxu0 0.0
  %70 = vmatprep.subr.mxu0 0.0
  %71 = vmatpush1.msra.mxu0 0.0
  %72 = vmatprep.subr.mxu0 0.0
  %73 = vmatpush1.msra.mxu0 0.0
  %74 = vmatprep.subr.mxu0 0.0
  %75 = vmatpush1.msra.mxu0 0.0
  %76 = vmatprep.subr.mxu0 0.0
  %77 = vmatpush1.msra.mxu0 0.0
  %78 = vmatprep.subr.mxu0 0.0
  %79 = vmatpush1.msra.mxu0 0.0
  %80 = vmatprep.subr.mxu0 0.0
  %81 = vmatpush1.msra.mxu0 0.0
  %82 = vmatprep.subr.mxu0 0.0
  %83 = vmatpush1.msra.mxu0 0.0
  %84 = vmatprep.subr.mxu0 0.0
  %85 = vmatpush1.msra.mxu0 0.0
  %86 = vmatprep.subr.mxu0 0.0
  %87 = vmatpush1.msra.mxu0 0.0
  %88 = vmatprep.subr.mxu0 0.0
  %89 = vmatpush1.msra.mxu0 0.0
  %90 = vmatprep.subr.mxu0 0.0
  %91 = vmatpush1.msra.mxu0 0.0
  %92 = vmatprep.subr.mxu0 0.0
  %93 = vmatpush1.msra.mxu0 0.0
  %94 = vmatprep.subr.mxu0 0.0
  %95 = vmatpush1.msra.mxu0 0.0
  %96 = vmatprep.subr.mxu0 0.0
  %97 = vmatpush1.msra.mxu0 0.0
  %98 = vmatprep.subr.mxu0 0.0
  %99 = vmatpush1.msra.mxu0 0.0
  %100 = vmatprep.subr.mxu0 0.0
  %101 = vmatpush1.msra.mxu0 0.0
  %102 = vmatprep.subr.mxu0 0.0
  %103 = vmatpush1.msra.mxu0 0.0
  %104 = vmatprep.subr.mxu0 0.0
  %105 = vmatpush1.msra.mxu0 0.0
  %106 = vmatprep.subr.mxu0 0.0
  %107 = vmatpush1.msra.mxu0 0.0
  %108 = vmatprep.mubr.f32.mxu0 0.0
  %109 = vmatmul.mubr.f32.gmra.mrb[0].mxu0 %v39
  %v110 = vpop.f32.mrb[0].mxu0
  %v111 = vadd.f32 0.0, %v110
  %v112 = vpop.f32.mrb[0].mxu0
  %113 = vmatprep.mubr.f32.mxu0 0.0
  %114 = vmatmul.mubr.f32.gmra.mrb[0].mxu0 %v42
  %v115 = vpop.f32.mrb[0].mxu0
  %v116 = vadd.f32 0.0, %v115
  %v117 = vpop.f32.mrb[0].mxu0
  %118 = vdwg.mxu0
  %v120 = vlaneseq
  %v121 = vshrl.u32 %v120, 7
  %v122 = vsub.s32 0, %v121
  %v123 = vrot.slane %v34, %v122
  %v125 = vadd.f32 %v123, %v111
  %v126 = vadd.f32 %v123, %v116
  %v127 = vld [vmem:[%s1] sm:$0xff]
  %v128 = vld [vmem:[%s1 + $0x8] sm:$0xff]
  %v129 = vld [vmem:[%s2] sm:$0x1]
  %v131 = vlaneseq
  %v132 = vshrl.u32 %v131, 7
  %v133 = vsub.s32 0, %v132
  %v134 = vrot.slane %v129, %v133
  %136 = vmatprep.subr.mxu0 0.0
  %137 = vmatpush1.msra.mxu0 %v127
  %138 = vmatprep.subr.mxu0 0.0
  %139 = vmatpush1.msra.mxu0 %v128
  %140 = vmatprep.subr.mxu0 0.0
  %141 = vmatpush1.msra.mxu0 0.0
  %142 = vmatprep.subr.mxu0 0.0
  %143 = vmatpush1.msra.mxu0 0.0
  %144 = vmatprep.subr.mxu0 0.0
  %145 = vmatpush1.msra.mxu0 0.0
  %146 = vmatprep.subr.mxu0 0.0
  %147 = vmatpush1.msra.mxu0 0.0
  %148 = vmatprep.subr.mxu0 0.0
  %149 = vmatpush1.msra.mxu0 0.0
  %150 = vmatprep.subr.mxu0 0.0
  %151 = vmatpush1.msra.mxu0 0.0
  %152 = vmatprep.subr.mxu0 0.0
  %153 = vmatpush1.msra.mxu0 0.0
  %154 = vmatprep.subr.mxu0 0.0
  %155 = vmatpush1.msra.mxu0 0.0
  %156 = vmatprep.subr.mxu0 0.0
  %157 = vmatpush1.msra.mxu0 0.0
  %158 = vmatprep.subr.mxu0 0.0
  %159 = vmatpush1.msra.mxu0 0.0
  %160 = vmatprep.subr.mxu0 0.0
  %161 = vmatpush1.msra.mxu0 0.0
  %162 = vmatprep.subr.mxu0 0.0
  %163 = vmatpush1.msra.mxu0 0.0
  %164 = vmatprep.subr.mxu0 0.0
  %165 = vmatpush1.msra.mxu0 0.0
  %166 = vmatprep.subr.mxu0 0.0
  %167 = vmatpush1.msra.mxu0 0.0
  %168 = vmatprep.subr.mxu0 0.0
  %169 = vmatpush1.msra.mxu0 0.0
  %170 = vmatprep.subr.mxu0 0.0
  %171 = vmatpush1.msra.mxu0 0.0
  %172 = vmatprep.subr.mxu0 0.0
  %173 = vmatpush1.msra.mxu0 0.0
  %174 = vmatprep.subr.mxu0 0.0
  %175 = vmatpush1.msra.mxu0 0.0
  %176 = vmatprep.subr.mxu0 0.0
  %177 = vmatpush1.msra.mxu0 0.0
  %178 = vmatprep.subr.mxu0 0.0
  %179 = vmatpush1.msra.mxu0 0.0
  %180 = vmatprep.subr.mxu0 0.0
  %181 = vmatpush1.msra.mxu0 0.0
  %182 = vmatprep.subr.mxu0 0.0
  %183 = vmatpush1.msra.mxu0 0.0
  %184 = vmatprep.subr.mxu0 0.0
  %185 = vmatpush1.msra.mxu0 0.0
  %186 = vmatprep.subr.mxu0 0.0
  %187 = vmatpush1.msra.mxu0 0.0
  %188 = vmatprep.subr.mxu0 0.0
  %189 = vmatpush1.msra.mxu0 0.0
  %190 = vmatprep.subr.mxu0 0.0
  %191 = vmatpush1.msra.mxu0 0.0
  %192 = vmatprep.subr.mxu0 0.0
  %193 = vmatpush1.msra.mxu0 0.0
  %194 = vmatprep.subr.mxu0 0.0
  %195 = vmatpush1.msra.mxu0 0.0
  %196 = vmatprep.subr.mxu0 0.0
  %197 = vmatpush1.msra.mxu0 0.0
  %198 = vmatprep.subr.mxu0 0.0
  %199 = vmatpush1.msra.mxu0 0.0
  %200 = vmatprep.mubr.f32.mxu0 0.0
  %201 = vmatmul.mubr.f32.gmra.mrb[0].mxu0 %v39
  %v202 = vpop.f32.mrb[0].mxu0
  %v203 = vadd.f32 %v134, %v202
  %v204 = vpop.f32.mrb[0].mxu0
  %205 = vmatprep.mubr.f32.mxu0 0.0
  %206 = vmatmul.mubr.f32.gmra.mrb[0].mxu0 %v42
  %v207 = vpop.f32.mrb[0].mxu0
  %v208 = vadd.f32 %v134, %v207
  %v209 = vpop.f32.mrb[0].mxu0
  %210 = vdwg.mxu0
  %vm211 = vcmp.gt.f32.partialorder %v203, 0.0
  %vm212 = vcmp.gt.f32.partialorder %v208, 0.0
  %v213 = vmul.f32 %v203, 0.01
  %v214 = vmul.f32 %v208, 0.01
  %v215 = vsel %vm211, %v203, %v213
  %v216 = vsel %vm212, %v208, %v214
  %v217 = vld [vmem:[%s6] sm:$0xff]
  %v218 = vld [vmem:[%s6 + $0x8] sm:$0xff]
  %v219 = vld [vmem:[%s6 + $0x10] sm:$0xff]
  %v220 = vld [vmem:[%s6 + $0x18] sm:$0xff]
  %vm221 = vcmask 261120
  %v223 = vsel %vm221, %v215, 0
  %v226 = vsel %vm221, %v216, 0
  %228 = vmatprep.subr.mxu0 0.0
  %229 = vmatpush1.msra.mxu0 %v217
  %230 = vmatprep.subr.mxu0 0.0
  %231 = vmatpush1.msra.mxu0 %v218
  %232 = vmatprep.subr.mxu0 0.0
  %233 = vmatpush1.msra.mxu0 %v219
  %234 = vmatprep.subr.mxu0 0.0
  %235 = vmatpush1.msra.mxu0 %v220
  %236 = vmatprep.subr.mxu0 0.0
  %237 = vmatpush1.msra.mxu0 0.0
  %238 = vmatprep.subr.mxu0 0.0
  %239 = vmatpush1.msra.mxu0 0.0
  %240 = vmatprep.subr.mxu0 0.0
  %241 = vmatpush1.msra.mxu0 0.0
  %242 = vmatprep.subr.mxu0 0.0
  %243 = vmatpush1.msra.mxu0 0.0
  %244 = vmatprep.subr.mxu0 0.0
  %245 = vmatpush1.msra.mxu0 0.0
  %246 = vmatprep.subr.mxu0 0.0
  %247 = vmatpush1.msra.mxu0 0.0
  %248 = vmatprep.subr.mxu0 0.0
  %249 = vmatpush1.msra.mxu0 0.0
  %250 = vmatprep.subr.mxu0 0.0
  %251 = vmatpush1.msra.mxu0 0.0
  %252 = vmatprep.subr.mxu0 0.0
  %253 = vmatpush1.msra.mxu0 0.0
  %254 = vmatprep.subr.mxu0 0.0
  %255 = vmatpush1.msra.mxu0 0.0
  %256 = vmatprep.subr.mxu0 0.0
  %257 = vmatpush1.msra.mxu0 0.0
  %258 = vmatprep.subr.mxu0 0.0
  %259 = vmatpush1.msra.mxu0 0.0
  %260 = vmatprep.subr.mxu0 0.0
  %261 = vmatpush1.msra.mxu0 0.0
  %262 = vmatprep.subr.mxu0 0.0
  %263 = vmatpush1.msra.mxu0 0.0
  %264 = vmatprep.subr.mxu0 0.0
  %265 = vmatpush1.msra.mxu0 0.0
  %266 = vmatprep.subr.mxu0 0.0
  %267 = vmatpush1.msra.mxu0 0.0
  %268 = vmatprep.subr.mxu0 0.0
  %269 = vmatpush1.msra.mxu0 0.0
  %270 = vmatprep.subr.mxu0 0.0
  %271 = vmatpush1.msra.mxu0 0.0
  %272 = vmatprep.subr.mxu0 0.0
  %273 = vmatpush1.msra.mxu0 0.0
  %274 = vmatprep.subr.mxu0 0.0
  %275 = vmatpush1.msra.mxu0 0.0
  %276 = vmatprep.subr.mxu0 0.0
  %277 = vmatpush1.msra.mxu0 0.0
  %278 = vmatprep.subr.mxu0 0.0
  %279 = vmatpush1.msra.mxu0 0.0
  %280 = vmatprep.subr.mxu0 0.0
  %281 = vmatpush1.msra.mxu0 0.0
  %282 = vmatprep.subr.mxu0 0.0
  %283 = vmatpush1.msra.mxu0 0.0
  %284 = vmatprep.subr.mxu0 0.0
  %285 = vmatpush1.msra.mxu0 0.0
  %286 = vmatprep.subr.mxu0 0.0
  %287 = vmatpush1.msra.mxu0 0.0
  %288 = vmatprep.subr.mxu0 0.0
  %289 = vmatpush1.msra.mxu0 0.0
  %290 = vmatprep.subr.mxu0 0.0
  %291 = vmatpush1.msra.mxu0 0.0
  %292 = vmatprep.mubr.f32.mxu0 0.0
  %293 = vmatmul.mubr.f32.gmra.mrb[0].mxu0 %v223
  %v294 = vpop.f32.mrb[0].mxu0
  %v295 = vadd.f32 0.0, %v294
  %v296 = vpop.f32.mrb[0].mxu0
  %297 = vmatprep.mubr.f32.mxu0 0.0
  %298 = vmatmul.mubr.f32.gmra.mrb[0].mxu0 %v226
  %v299 = vpop.f32.mrb[0].mxu0
  %v300 = vadd.f32 0.0, %v299
  %v301 = vpop.f32.mrb[0].mxu0
  %302 = vdwg.mxu0
  %v303 = vadd.f32 %v125, %v295
  %v304 = vadd.f32 %v126, %v300
  %v305 = vld [vmem:[%s3] sm:$0xff]
  %v306 = vld [vmem:[%s3 + $0x8] sm:$0xff]
  %v307 = vld [vmem:[%s3 + $0x10] sm:$0xff]
  %v308 = vld [vmem:[%s3 + $0x18] sm:$0xff]
  %v309 = vld [vmem:[%s4] sm:$0x1]
  %v311 = vlaneseq
  %v312 = vshrl.u32 %v311, 7
  %v313 = vsub.s32 0, %v312
  %v314 = vrot.slane %v309, %v313
  %316 = vmatprep.subr.mxu0 0.0
  %317 = vmatpush1.msra.mxu0 %v305
  %318 = vmatprep.subr.mxu0 0.0
  %319 = vmatpush1.msra.mxu0 %v306
  %320 = vmatprep.subr.mxu0 0.0
  %321 = vmatpush1.msra.mxu0 %v307
  %322 = vmatprep.subr.mxu0 0.0
  %323 = vmatpush1.msra.mxu0 %v308
  %324 = vmatprep.subr.mxu0 0.0
  %325 = vmatpush1.msra.mxu0 0.0
  %326 = vmatprep.subr.mxu0 0.0
  %327 = vmatpush1.msra.mxu0 0.0
  %328 = vmatprep.subr.mxu0 0.0
  %329 = vmatpush1.msra.mxu0 0.0
  %330 = vmatprep.subr.mxu0 0.0
  %331 = vmatpush1.msra.mxu0 0.0
  %332 = vmatprep.subr.mxu0 0.0
  %333 = vmatpush1.msra.mxu0 0.0
  %334 = vmatprep.subr.mxu0 0.0
  %335 = vmatpush1.msra.mxu0 0.0
  %336 = vmatprep.subr.mxu0 0.0
  %337 = vmatpush1.msra.mxu0 0.0
  %338 = vmatprep.subr.mxu0 0.0
  %339 = vmatpush1.msra.mxu0 0.0
  %340 = vmatprep.subr.mxu0 0.0
  %341 = vmatpush1.msra.mxu0 0.0
  %342 = vmatprep.subr.mxu0 0.0
  %343 = vmatpush1.msra.mxu0 0.0
  %344 = vmatprep.subr.mxu0 0.0
  %345 = vmatpush1.msra.mxu0 0.0
  %346 = vmatprep.subr.mxu0 0.0
  %347 = vmatpush1.msra.mxu0 0.0
  %348 = vmatprep.subr.mxu0 0.0
  %349 = vmatpush1.msra.mxu0 0.0
  %350 = vmatprep.subr.mxu0 0.0
  %351 = vmatpush1.msra.mxu0 0.0
  %352 = vmatprep.subr.mxu0 0.0
  %353 = vmatpush1.msra.mxu0 0.0
  %354 = vmatprep.subr.mxu0 0.0
  %355 = vmatpush1.msra.mxu0 0.0
  %356 = vmatprep.subr.mxu0 0.0
  %357 = vmatpush1.msra.mxu0 0.0
  %358 = vmatprep.subr.mxu0 0.0
  %359 = vmatpush1.msra.mxu0 0.0
  %360 = vmatprep.subr.mxu0 0.0
  %361 = vmatpush1.msra.mxu0 0.0
  %362 = vmatprep.subr.mxu0 0.0
  %363 = vmatpush1.msra.mxu0 0.0
  %364 = vmatprep.subr.mxu0 0.0
  %365 = vmatpush1.msra.mxu0 0.0
  %366 = vmatprep.subr.mxu0 0.0
  %367 = vmatpush1.msra.mxu0 0.0
  %368 = vmatprep.subr.mxu0 0.0
  %369 = vmatpush1.msra.mxu0 0.0
  %370 = vmatprep.subr.mxu0 0.0
  %371 = vmatpush1.msra.mxu0 0.0
  %372 = vmatprep.subr.mxu0 0.0
  %373 = vmatpush1.msra.mxu0 0.0
  %374 = vmatprep.subr.mxu0 0.0
  %375 = vmatpush1.msra.mxu0 0.0
  %376 = vmatprep.subr.mxu0 0.0
  %377 = vmatpush1.msra.mxu0 0.0
  %378 = vmatprep.subr.mxu0 0.0
  %379 = vmatpush1.msra.mxu0 0.0
  %380 = vmatprep.mubr.f32.mxu0 0.0
  %381 = vmatmul.mubr.f32.gmra.mrb[0].mxu0 %v223
  %v382 = vpop.f32.mrb[0].mxu0
  %v383 = vadd.f32 %v314, %v382
  %v384 = vpop.f32.mrb[0].mxu0
  %385 = vmatprep.mubr.f32.mxu0 0.0
  %386 = vmatmul.mubr.f32.gmra.mrb[0].mxu0 %v226
  %v387 = vpop.f32.mrb[0].mxu0
  %v388 = vadd.f32 %v314, %v387
  %v389 = vpop.f32.mrb[0].mxu0
  %390 = vdwg.mxu0
  %vm391 = vcmp.gt.f32.partialorder %v383, 0.0
  %vm392 = vcmp.gt.f32.partialorder %v388, 0.0
  %v393 = vmul.f32 %v383, 0.01
  %v394 = vmul.f32 %v388, 0.01
  %v395 = vsel %vm391, %v383, %v393
  %v396 = vsel %vm392, %v388, %v394
  %v397 = vld [vmem:[%s7] sm:$0xff]
  %v398 = vld [vmem:[%s7 + $0x8] sm:$0xff]
  %v399 = vld [vmem:[%s7 + $0x10] sm:$0xff]
  %v400 = vld [vmem:[%s7 + $0x18] sm:$0xff]
  %v401 = vld [vmem:[%s7 + $0x20] sm:$0xff]
  %v402 = vld [vmem:[%s7 + $0x28] sm:$0xff]
  %v403 = vld [vmem:[%s7 + $0x30] sm:$0xff]
  %v404 = vld [vmem:[%s7 + $0x38] sm:$0xff]
  %vm405 = vcmask 523264
  %v407 = vsel %vm405, %v395, 0
  %v410 = vsel %vm405, %v396, 0
  %412 = vmatprep.subr.mxu0 0.0
  %413 = vmatpush1.msra.mxu0 %v397
  %414 = vmatprep.subr.mxu0 0.0
  %415 = vmatpush1.msra.mxu0 %v398
  %416 = vmatprep.subr.mxu0 0.0
  %417 = vmatpush1.msra.mxu0 %v399
  %418 = vmatprep.subr.mxu0 0.0
  %419 = vmatpush1.msra.mxu0 %v400
  %420 = vmatprep.subr.mxu0 0.0
  %421 = vmatpush1.msra.mxu0 %v401
  %422 = vmatprep.subr.mxu0 0.0
  %423 = vmatpush1.msra.mxu0 %v402
  %424 = vmatprep.subr.mxu0 0.0
  %425 = vmatpush1.msra.mxu0 %v403
  %426 = vmatprep.subr.mxu0 0.0
  %427 = vmatpush1.msra.mxu0 %v404
  %428 = vmatprep.subr.mxu0 0.0
  %429 = vmatpush1.msra.mxu0 0.0
  %430 = vmatprep.subr.mxu0 0.0
  %431 = vmatpush1.msra.mxu0 0.0
  %432 = vmatprep.subr.mxu0 0.0
  %433 = vmatpush1.msra.mxu0 0.0
  %434 = vmatprep.subr.mxu0 0.0
  %435 = vmatpush1.msra.mxu0 0.0
  %436 = vmatprep.subr.mxu0 0.0
  %437 = vmatpush1.msra.mxu0 0.0
  %438 = vmatprep.subr.mxu0 0.0
  %439 = vmatpush1.msra.mxu0 0.0
  %440 = vmatprep.subr.mxu0 0.0
  %441 = vmatpush1.msra.mxu0 0.0
  %442 = vmatprep.subr.mxu0 0.0
  %443 = vmatpush1.msra.mxu0 0.0
  %444 = vmatprep.subr.mxu0 0.0
  %445 = vmatpush1.msra.mxu0 0.0
  %446 = vmatprep.subr.mxu0 0.0
  %447 = vmatpush1.msra.mxu0 0.0
  %448 = vmatprep.subr.mxu0 0.0
  %449 = vmatpush1.msra.mxu0 0.0
  %450 = vmatprep.subr.mxu0 0.0
  %451 = vmatpush1.msra.mxu0 0.0
  %452 = vmatprep.subr.mxu0 0.0
  %453 = vmatpush1.msra.mxu0 0.0
  %454 = vmatprep.subr.mxu0 0.0
  %455 = vmatpush1.msra.mxu0 0.0
  %456 = vmatprep.subr.mxu0 0.0
  %457 = vmatpush1.msra.mxu0 0.0
  %458 = vmatprep.subr.mxu0 0.0
  %459 = vmatpush1.msra.mxu0 0.0
  %460 = vmatprep.subr.mxu0 0.0
  %461 = vmatpush1.msra.mxu0 0.0
  %462 = vmatprep.subr.mxu0 0.0
  %463 = vmatpush1.msra.mxu0 0.0
  %464 = vmatprep.subr.mxu0 0.0
  %465 = vmatpush1.msra.mxu0 0.0
  %466 = vmatprep.subr.mxu0 0.0
  %467 = vmatpush1.msra.mxu0 0.0
  %468 = vmatprep.subr.mxu0 0.0
  %469 = vmatpush1.msra.mxu0 0.0
  %470 = vmatprep.subr.mxu0 0.0
  %471 = vmatpush1.msra.mxu0 0.0
  %472 = vmatprep.subr.mxu0 0.0
  %473 = vmatpush1.msra.mxu0 0.0
  %474 = vmatprep.subr.mxu0 0.0
  %475 = vmatpush1.msra.mxu0 0.0
  %476 = vmatprep.mubr.f32.mxu0 0.0
  %477 = vmatmul.mubr.f32.gmra.mrb[0].mxu0 %v407
  %v478 = vpop.f32.mrb[0].mxu0
  %v479 = vadd.f32 0.0, %v478
  %v480 = vpop.f32.mrb[0].mxu0
  %481 = vmatprep.mubr.f32.mxu0 0.0
  %482 = vmatmul.mubr.f32.gmra.mrb[0].mxu0 %v410
  %v483 = vpop.f32.mrb[0].mxu0
  %v484 = vadd.f32 0.0, %v483
  %v485 = vpop.f32.mrb[0].mxu0
  %486 = vdwg.mxu0
  %v487 = vadd.f32 %v303, %v479
  %v488 = vadd.f32 %v304, %v484
  %vm489 = vcmask 64512
  %490 = vst.msk [vmem:[%s9] sm:$0xff] %vm489, %v487
  %491 = vst.msk [vmem:[%s9 + $0x8] sm:$0xff] %vm489, %v488
  // Predicated region
  $region38: #{tpu_custom_call.1} parent=0 // pred_check
    _
  $region39: #{tpu_custom_call.1} parent=0 // pred_check_branch
    %493 = sbr.rel (0) target = $region41
  $region40: #{tpu_custom_call.1} parent=0 // pred_region
    _
  $region41: #{tpu_custom_call.1} parent=0 // pred_fallthru
    _
  // Predicated region
  $region42: #{tpu_custom_call.1} parent=0 // pred_check
    _
  $region43: #{tpu_custom_call.1} parent=0 // pred_check_branch
    %495 = sbr.rel (0) target = $region45
  $region44: #{tpu_custom_call.1} parent=0 // pred_region
    _
  $region45: #{tpu_custom_call.1} parent=0 // pred_fallthru
    _

</llo_original>
